<compile_context>
chip_gen: v5e
topology: v5e:2x2
jax: 0.10.0
libtpu: 0.0.40
codegen_flags: <defaults>
</compile_context>

<pallas_src>
import functools

import jax
import jax.numpy as jnp
from jax.experimental import pallas as pl
from jax.experimental.pallas import tpu as pltpu

_LANE = 1024           # lane-dense slab width (multiple of 128)
_MAX_TILE_ROWS = 256   # 256 x 1024 x 4B = 1 MiB per f32 tile (multiple of 8/16/32)


def _norm_kernel(x_ref, o_ref, *, inv):
    # Elementwise x * (1/norm). Compute in f32, cast on store so bf16/fp16
    # inputs don't pay a low-precision reciprocal/multiply.
    o_ref[...] = (x_ref[...].astype(jnp.float32) * inv).astype(o_ref.dtype)


def norm_forward(x, norm):
    """Pallas TPU forward for deepbays `Norm`: returns x / norm."""
    orig_shape = x.shape
    dtype = x.dtype
    total = x.size
    inv = 1.0 / float(norm)   # norm is a plain Python scalar on the module

    flat = x.reshape(-1)

    if total <= _MAX_TILE_ROWS * _LANE:
        # Small input: a single tile equal to the full (padded) slab.
        pad = (-total) % _LANE
        multi_tile = False
    else:
        # Large input: pad so the row tile divides evenly (no ragged tiles).
        pad = (-total) % (_MAX_TILE_ROWS * _LANE)
        multi_tile = True

    if pad:
        flat = jnp.pad(flat, (0, pad))

    rows = flat.size // _LANE
    x2d = flat.reshape(rows, _LANE)
    tile_r = _MAX_TILE_ROWS if multi_tile else rows
    grid = (rows // tile_r,)

    out2d = pl.pallas_call(
        functools.partial(_norm_kernel, inv=inv),
        out_shape=jax.ShapeDtypeStruct((rows, _LANE), dtype),
        grid=grid,
        in_specs=[pl.BlockSpec((tile_r, _LANE), lambda i: (i, 0))],
        out_specs=pl.BlockSpec((tile_r, _LANE), lambda i: (i, 0)),
        input_output_aliases={0: 0},  # reuse the (temp) input HBM buffer
        compiler_params=pltpu.CompilerParams(
            dimension_semantics=("parallel",),  # megacore / v7x dual-TC sharding
        ),
    )(x2d)

    out = out2d.reshape(-1)
    if pad:
        out = out[:total]
    return out.reshape(orig_shape)


if __name__ == "__main__":
    key = jax.random.PRNGKey(0)
    norm = 3.0  # module stores it as a plain scalar

    # Primary example: small NCHW conv activation.
    x = jax.random.normal(key, (2, 4, 16, 16), dtype=jnp.float32)
    out = jax.block_until_ready(norm_forward(x, norm))
    ref = x / norm
    assert out.shape == x.shape
    assert out.dtype == x.dtype
    assert jnp.allclose(out, ref, atol=1e-6, rtol=1e-5)

    # Ragged element count (not a multiple of 128) -> exercises the padding path.
    k1, k2 = jax.random.split(key)
    x_ragged = jax.random.normal(k1, (3, 5, 7, 11), dtype=jnp.float32)
    out_r = jax.block_until_ready(norm_forward(x_ragged, norm))
    assert jnp.allclose(out_r, x_ragged / norm, atol=1e-6, rtol=1e-5)

    # Larger input -> exercises the tiled, multi-step gridded path.
    x_big = jax.random.normal(k2, (8, 16, 64, 64), dtype=jnp.float32)
    out_b = jax.block_until_ready(norm_forward(x_big, norm))
    assert jnp.allclose(out_b, x_big / norm, atol=1e-6, rtol=1e-5)

    print("KERNEL_OK")
</pallas_src>

<mosaic_0001>
module attributes {stable_mosaic.version = 11 : i64} {
  func.func @_norm_kernel(%arg0: i32, %arg1: memref<2x1024xf32, #tpu.memory_space<vmem>>, %arg2: memref<2x1024xf32, #tpu.memory_space<vmem>>) attributes {dimension_semantics = [#tpu.dimension_semantics<parallel>], iteration_bounds = array<i64: 1>, scalar_prefetch = 0 : i64, scratch_operands = 0 : i64, tpu.core_type = #tpu.core_type<tc>, window_params = [{transform_indices = @transform_0, window_bounds = array<i64: 2, 1024>}, {transform_indices = @transform_1, window_bounds = array<i64: 2, 1024>}]} {
    %c0 = arith.constant 0 : index
    %c0_0 = arith.constant 0 : index
    %0 = vector.load %arg1[%c0, %c0_0] : memref<2x1024xf32, #tpu.memory_space<vmem>>, vector<2x1024xf32>
    %cst = arith.constant 0.333333343 : f32
    %1 = vector.broadcast %cst : f32 to vector<2x1024xf32>
    %2 = arith.mulf %0, %1 : vector<2x1024xf32>
    %c0_1 = arith.constant 0 : index
    %c0_2 = arith.constant 0 : index
    %3 = vector.load %arg2[%c0_1, %c0_2] : memref<2x1024xf32, #tpu.memory_space<vmem>>, vector<2x1024xf32>
    tpu.vector_store %arg2[%c0_1, %c0_2], %2 {strides = array<i32>} : memref<2x1024xf32, #tpu.memory_space<vmem>>, vector<2x1024xf32>,
    return
  }
  func.func @transform_0(%arg0: i32) -> (i32, i32) {
    %c0_i32 = arith.constant 0 : i32
    %c0_i32_0 = arith.constant 0 : i32
    return %arg0, %c0_i32 : i32, i32
  }
  func.func @transform_1(%arg0: i32) -> (i32, i32) {
    %c0_i32 = arith.constant 0 : i32
    %c0_i32_0 = arith.constant 0 : i32
    return %arg0, %c0_i32 : i32, i32
  }
}

</mosaic_0001>

<llo_original>
// kernel: tpu_custom_call.1
$region0: #{tpu_custom_call.1}
  #allocation0 [shape = 'u32[]', space=smem, size = 0x4, offset = 0x4, fixed_abs, tag = 'smem constant byte address 0x4 - core index']
  #allocation1 [shape = 'u32[72,128]{1,0:T(1,128)}', space=vmem, size = 0x9000, scoped, tag = 'internal scratch']
  %s0 = inlined_call_operand.hbm [shape: f32[2,1024], index: 0, kind: input, shape index: {}, may-alias: {0,1}]
  %s1 = inlined_call_operand.hbm [shape: f32[2,1024], index: 1, kind: output, shape index: {}, may-alias: {0,1}]
  %s2 = sld [smem:[#allocation0]]
  $region18: #{tpu_custom_call.1} parent=0
    _
  %s4 = ssub.s32 1, %s2
  %s5 = scalar_select 0, %s4, %s2
  $region1: #{tpu_custom_call.1} parent=0
    #allocation2 [shape = 'u8[8192]{0}', space=vmem, size = 0x2000, scoped, tag = 'input window, operand 0, single buffered']
    #allocation3 [shape = 's32[1]{0}', space=sflag, size = 0x4, scoped, tag = 'scoped memory for tpu_custom_call.1']
    #allocation4 [shape = 's32[1]{0}', space=sflag, size = 0x4, scoped, tag = 'scoped memory for tpu_custom_call.1']
    #allocation5 [shape = 'u8[8192]{0}', space=vmem, size = 0x2000, scoped, tag = 'output window, operand 0, single buffered']
    %6 = vsyncpa [#allocation3], 0
    %7 = vsyncpa [#allocation4], 0
    // Predicated region
    $region2: #{tpu_custom_call.1} parent=1 // pred_check
      _
    $region3: #{tpu_custom_call.1} parent=1 // pred_check_branch
      %9 = sbr.rel (0) target = $region5
    $region4: #{tpu_custom_call.1} parent=1 // pred_region
      %11 = vsyncadd [#allocation3], 0
      %s13 = sshll.u32 %s0, 4
      %s14 = int_to_ptr.hbm [resolvable:$true] %s13
      %s15 = sshll.u32 [#allocation2], 4
      %s16 = int_to_ptr.vmem [resolvable:$true] %s15
      %18 = dma.hbm_to_vmem [thread:$0]  %s14, 256, %s16, [#allocation3]
    $region5: #{tpu_custom_call.1} parent=1 // pred_fallthru
      _
    // Predicated region
    $region6: #{tpu_custom_call.1} parent=1 // pred_check
      _
    $region7: #{tpu_custom_call.1} parent=1 // pred_check_branch
      %20 = sbr.rel (0) target = $region9
    $region8: #{tpu_custom_call.1} parent=1 // pred_region
      %22 = dma.done [#allocation3], 256
    $region9: #{tpu_custom_call.1} parent=1 // pred_fallthru
      _
    %v23 = vld [vmem:[#allocation2] sm:$0xff]
    %v24 = vld [vmem:[#allocation2 + $0x8] sm:$0xff]
    %v25 = vmul.f32 %v23, 0.33333334
    %v26 = vmul.f32 %v24, 0.33333334
    %27 = vst [vmem:[#allocation5] sm:$0xff] %v25
    %28 = vst [vmem:[#allocation5 + $0x8] sm:$0xff] %v26
    // Predicated region
    $region10: #{tpu_custom_call.1} parent=1 // pred_check
      _
    $region11: #{tpu_custom_call.1} parent=1 // pred_check_branch
      %30 = sbr.rel (0) target = $region13
    $region12: #{tpu_custom_call.1} parent=1 // pred_region
      %32 = vsyncadd [#allocation4], 0
      %s34 = sshll.u32 [#allocation5], 4
      %s35 = int_to_ptr.vmem [resolvable:$true] %s34
      %s36 = sshll.u32 %s1, 4
      %s37 = int_to_ptr.hbm [resolvable:$true] %s36
      %39 = dma.vmem_to_hbm [thread:$0]  %s35, 256, %s37, [#allocation4]
    $region13: #{tpu_custom_call.1} parent=1 // pred_fallthru
      _
    // Predicated region
    $region14: #{tpu_custom_call.1} parent=1 // pred_check
      _
    $region15: #{tpu_custom_call.1} parent=1 // pred_check_branch
      %41 = sbr.rel (0) target = $region17
    $region16: #{tpu_custom_call.1} parent=1 // pred_region
      %43 = dma.done [#allocation4], 256
    $region17: #{tpu_custom_call.1} parent=1 // pred_fallthru
      _
    %44 = vsyncpa [#allocation3], 1
    %45 = vsyncpa [#allocation4], 1

</llo_original>
